<compile_context>
chip_gen: v7x
topology: tpu7x:2x2x1
jax: 0.10.0
libtpu: 0.0.40
codegen_flags: <defaults>
</compile_context>

<pallas_src>
import functools

import jax
import jax.numpy as jnp
from jax import lax
from jax.experimental import pallas as pl
from jax.experimental.pallas import tpu as pltpu


def _round_up(n, m):
  return ((n + m - 1) // m) * m


def _drb_kernel(*refs, has_shortcut, units, negative_slope, eps):
  """One batch tile of DenseResidualBlock. Feature dims are lane-padded."""
  if has_shortcut:
    (x_ref, w1sc_ref, b1_ref, bsc_ref, w2_ref, b2_ref,
     gamma_ref, beta_ref, o_ref) = refs
  else:
    (x_ref, w1_ref, b1_ref, w2_ref, b2_ref,
     gamma_ref, beta_ref, o_ref) = refs

  mm_dtype = w2_ref.dtype          # bf16 (default) or f32
  un_p = o_ref.shape[-1]           # padded feature width (multiple of 128)

  def leaky(v):
    return jnp.where(v > 0, v, negative_slope * v)

  x = x_ref[...]                   # fp32 (TB, in_p)
  xm = x.astype(mm_dtype)

  if has_shortcut:
    # Fused x @ [W1 | Wsc]: one MXU pass feeds both branches.
    hs = jnp.dot(xm, w1sc_ref[...], preferred_element_type=jnp.float32)
    h_pre = hs[:, :un_p]
    sc = hs[:, un_p:] + bsc_ref[...]
  else:
    # Identity shortcut (input_dim == units): no matmul at all.
    h_pre = jnp.dot(xm, w1_ref[...], preferred_element_type=jnp.float32)
    sc = x.astype(jnp.float32)

  h = leaky(h_pre + b1_ref[...])
  h = jnp.dot(h.astype(mm_dtype), w2_ref[...],
              preferred_element_type=jnp.float32) + b2_ref[...]
  h = leaky(h)
  y = leaky(h + sc)                # padded lanes are exactly 0 by construction

  # LayerNorm over the true (unpadded) feature lanes only.
  lane = lax.broadcasted_iota(jnp.int32, (1, un_p), 1)
  mask = (lane < units).astype(jnp.float32)
  inv_n = 1.0 / float(units)
  mean = jnp.sum(y * mask, axis=-1, keepdims=True) * inv_n
  d = (y - mean) * mask
  var = jnp.sum(d * d, axis=-1, keepdims=True) * inv_n
  y_hat = d * lax.rsqrt(var + eps)
  o_ref[...] = (y_hat * gamma_ref[...] + beta_ref[...]).astype(o_ref.dtype)


def dense_residual_block(x, params, *, negative_slope=0.1, eps=1e-5,
                         block_batch=256, matmul_dtype=jnp.bfloat16):
  """x: (B, input_dim) float32.  params: PyTorch-convention weights.

  If 'wsc' is absent from params the shortcut is identity (input_dim==units).
  """
  B, input_dim = x.shape
  units = params["w1"].shape[0]
  has_shortcut = "wsc" in params
  if not has_shortcut and input_dim != units:
    raise ValueError("identity shortcut requires input_dim == units")

  # Lane-dense padded feature widths.
  in_p = _round_up(input_dim, 128)
  un_p = _round_up(units, 128)
  mm_bytes = jnp.dtype(matmul_dtype).itemsize

  # --- pick a batch tile that fits a conservative VMEM budget (v7x: 64 MiB) ---
  def vmem_est(tb):
    w1_cols = 2 * un_p if has_shortcut else un_p
    weights = (in_p * w1_cols + un_p * un_p) * mm_bytes * 2   # (conservative x2)
    vectors = 5 * un_p * 4 * 2
    io = 2 * (tb * in_p + tb * un_p) * 4                      # double-buffered tiles
    inter = tb * (w1_cols + 4 * un_p) * 4                     # fp32 intermediates
    return weights + vectors + io + inter

  VMEM_BUDGET = 44 * 1024 * 1024
  TB = max(8, _round_up(min(int(block_batch), _round_up(B, 8)), 8))
  while TB > 8 and vmem_est(TB) > VMEM_BUDGET:
    TB = max(8, _round_up(TB // 2, 8))

  Bp = _round_up(B, TB)
  grid = (Bp // TB,)

  # --- one-time layout plumbing (outside the hot loop) ---
  f32 = jnp.float32
  x_p = jnp.pad(x.astype(f32), ((0, Bp - B), (0, in_p - input_dim)))

  def pad_w_t(w, rows, cols):              # torch (out, in) -> padded (in, out)
    wt = w.astype(f32).T
    return jnp.pad(wt, ((0, rows - wt.shape[0]), (0, cols - wt.shape[1])))

  def pad_vec(v):
    return jnp.pad(v.astype(f32).reshape(1, -1), ((0, 0), (0, un_p - units)))

  w1_t = pad_w_t(params["w1"], in_p, un_p)
  w2_t = pad_w_t(params["w2"], un_p, un_p).astype(matmul_dtype)
  b1 = pad_vec(params["b1"])
  b2 = pad_vec(params["b2"])
  gamma = pad_vec(params["gamma"])
  beta = pad_vec(params["beta"])

  def const2d(shape):
    return pl.BlockSpec(shape, lambda i: (0, 0))   # VMEM-resident across grid

  x_spec = pl.BlockSpec((TB, in_p), lambda i: (i, 0))

  if has_shortcut:
    wsc_t = pad_w_t(params["wsc"], in_p, un_p)
    w1sc = jnp.concatenate([w1_t, wsc_t], axis=1).astype(matmul_dtype)
    bsc = pad_vec(params["bsc"])
    inputs = (x_p, w1sc, b1, bsc, w2_t, b2, gamma, beta)
    in_specs = [x_spec, const2d((in_p, 2 * un_p)), const2d((1, un_p)),
                const2d((1, un_p)), const2d((un_p, un_p)), const2d((1, un_p)),
                const2d((1, un_p)), const2d((1, un_p))]
  else:
    w1c = w1_t.astype(matmul_dtype)
    inputs = (x_p, w1c, b1, w2_t, b2, gamma, beta)
    in_specs = [x_spec, const2d((in_p, un_p)), const2d((1, un_p)),
                const2d((un_p, un_p)), const2d((1, un_p)),
                const2d((1, un_p)), const2d((1, un_p))]

  kernel = functools.partial(
      _drb_kernel, has_shortcut=has_shortcut, units=units,
      negative_slope=float(negative_slope), eps=float(eps))

  w1_cols = 2 * un_p if has_shortcut else un_p
  flops = 2 * Bp * in_p * w1_cols + 2 * Bp * un_p * un_p + 10 * Bp * un_p
  bytes_accessed = (sum(int(a.size) * a.dtype.itemsize for a in inputs)
                    + Bp * un_p * 4)
  cost = pl.CostEstimate(flops=int(flops), transcendentals=int(Bp),
                         bytes_accessed=int(bytes_accessed))

  vmem_limit = int(min(60 * 1024 * 1024,
                       max(int(vmem_est(TB) * 1.25), 16 * 1024 * 1024)))

  out_p = pl.pallas_call(
      kernel,
      out_shape=jax.ShapeDtypeStruct((Bp, un_p), jnp.float32),
      grid=grid,
      in_specs=in_specs,
      out_specs=pl.BlockSpec((TB, un_p), lambda i: (i, 0)),
      compiler_params=pltpu.CompilerParams(
          dimension_semantics=("parallel",),
          vmem_limit_bytes=vmem_limit),
      cost_estimate=cost,
  )(*inputs)

  return out_p[:B, :units]


def init_params(key, input_dim, units):
  """Matches the module init: kaiming_uniform_(a=0.1), zero bias,
  LayerNorm weight=1 / bias=0; shortcut Linear only when input_dim != units."""
  a = 0.1

  def kaiming_uniform(k, out_f, in_f):
    bound = jnp.sqrt(6.0 / ((1.0 + a * a) * in_f))
    return jax.random.uniform(k, (out_f, in_f), jnp.float32, -bound, bound)

  k1, k2, k3 = jax.random.split(key, 3)
  params = {
      "w1": kaiming_uniform(k1, units, input_dim),
      "b1": jnp.zeros((units,), jnp.float32),
      "w2": kaiming_uniform(k2, units, units),
      "b2": jnp.zeros((units,), jnp.float32),
      "gamma": jnp.ones((units,), jnp.float32),
      "beta": jnp.zeros((units,), jnp.float32),
  }
  if input_dim != units:
    params["wsc"] = kaiming_uniform(k3, units, input_dim)
    params["bsc"] = jnp.zeros((units,), jnp.float32)
  return params


def reference(x, params, negative_slope=0.1, eps=1e-5):
  """Pure-JAX fp32 reference matching the PyTorch module."""
  def leaky(v):
    return jnp.where(v > 0, v, negative_slope * v)
  if "wsc" in params:
    sc = x @ params["wsc"].T + params["bsc"]
  else:
    sc = x
  h = leaky(x @ params["w1"].T + params["b1"])
  h = leaky(h @ params["w2"].T + params["b2"])
  y = leaky(h + sc)
  mean = jnp.mean(y, axis=-1, keepdims=True)
  var = jnp.mean((y - mean) ** 2, axis=-1, keepdims=True)
  return (y - mean) / jnp.sqrt(var + eps) * params["gamma"] + params["beta"]


if __name__ == "__main__":
  key = jax.random.PRNGKey(0)
  k_x, k_p, k_x2, k_p2 = jax.random.split(key, 4)

  # Case 1: input_dim != units -> learned linear shortcut (fused W1||Wsc path).
  B, INPUT_DIM, UNITS = 8, 16, 32
  x = jax.random.normal(k_x, (B, INPUT_DIM), jnp.float32)
  params = init_params(k_p, INPUT_DIM, UNITS)
  ref = reference(x, params)

  out_bf16 = jax.block_until_ready(dense_residual_block(x, params))
  assert out_bf16.shape == (B, UNITS)
  assert jnp.allclose(out_bf16, ref, atol=5e-2, rtol=5e-2)   # bf16 operands

  out_f32 = jax.block_until_ready(
      dense_residual_block(x, params, matmul_dtype=jnp.float32))
  assert jnp.allclose(out_f32, ref, atol=1e-4, rtol=1e-4)    # fp32 operands

  # Case 2: input_dim == units -> identity shortcut (no shortcut matmul).
  x2 = jax.random.normal(k_x2, (B, UNITS), jnp.float32)
  params2 = init_params(k_p2, UNITS, UNITS)
  ref2 = reference(x2, params2)
  out2 = jax.block_until_ready(
      dense_residual_block(x2, params2, matmul_dtype=jnp.float32))
  assert out2.shape == (B, UNITS)
  assert jnp.allclose(out2, ref2, atol=1e-4, rtol=1e-4)

  print("KERNEL_OK")
</pallas_src>

<mosaic_0001>
module attributes {stable_mosaic.version = 11 : i64} {
  func.func @_drb_kernel(%arg0: i32, %arg1: memref<8x128xf32, #tpu.memory_space<vmem>>, %arg2: memref<128x256xbf16, #tpu.memory_space<vmem>>, %arg3: memref<1x128xf32, #tpu.memory_space<vmem>>, %arg4: memref<1x128xf32, #tpu.memory_space<vmem>>, %arg5: memref<128x128xbf16, #tpu.memory_space<vmem>>, %arg6: memref<1x128xf32, #tpu.memory_space<vmem>>, %arg7: memref<1x128xf32, #tpu.memory_space<vmem>>, %arg8: memref<1x128xf32, #tpu.memory_space<vmem>>, %arg9: memref<8x128xf32, #tpu.memory_space<vmem>>) attributes {dimension_semantics = [#tpu.dimension_semantics<parallel>], iteration_bounds = array<i64: 1>, scalar_prefetch = 0 : i64, scratch_operands = 0 : i64, tpu.core_type = #tpu.core_type<tc>, window_params = [{transform_indices = @transform_0, window_bounds = array<i64: 8, 128>}, {pipeline_mode = #tpu.pipeline_mode<synchronous>, transform_indices = @transform_1, window_bounds = array<i64: 128, 256>}, {pipeline_mode = #tpu.pipeline_mode<synchronous>, transform_indices = @transform_2, window_bounds = array<i64: 1, 128>}, {pipeline_mode = #tpu.pipeline_mode<synchronous>, transform_indices = @transform_3, window_bounds = array<i64: 1, 128>}, {pipeline_mode = #tpu.pipeline_mode<synchronous>, transform_indices = @transform_4, window_bounds = array<i64: 128, 128>}, {pipeline_mode = #tpu.pipeline_mode<synchronous>, transform_indices = @transform_5, window_bounds = array<i64: 1, 128>}, {pipeline_mode = #tpu.pipeline_mode<synchronous>, transform_indices = @transform_6, window_bounds = array<i64: 1, 128>}, {pipeline_mode = #tpu.pipeline_mode<synchronous>, transform_indices = @transform_7, window_bounds = array<i64: 1, 128>}, {transform_indices = @transform_8, window_bounds = array<i64: 8, 128>}]} {
    %c0 = arith.constant 0 : index
    %c0_0 = arith.constant 0 : index
    %0 = vector.load %arg1[%c0, %c0_0] : memref<8x128xf32, #tpu.memory_space<vmem>>, vector<8x128xf32>
    %1 = arith.truncf %0 : vector<8x128xf32> to vector<8x128xbf16>
    %c0_1 = arith.constant 0 : index
    %c0_2 = arith.constant 0 : index
    %2 = vector.load %arg2[%c0_1, %c0_2] : memref<128x256xbf16, #tpu.memory_space<vmem>>, vector<128x256xbf16>
    %cst = arith.constant dense<0.000000e+00> : vector<8x256xf32>
    %3 = tpu.matmul %1, %2, %cst {dimension_numbers = #tpu.dot_dimension_numbers<[1], [0], [0], [1], [0, 0, 1, 1], [], []>} : vector<8x128xbf16>, vector<128x256xbf16>, vector<8x256xf32> -> vector<8x256xf32>
    %4 = vector.extract_strided_slice %3 {offsets = [0, 0], sizes = [8, 128], strides = [1, 1]} : vector<8x256xf32> to vector<8x128xf32>
    %5 = vector.extract_strided_slice %3 {offsets = [0, 128], sizes = [8, 128], strides = [1, 1]} : vector<8x256xf32> to vector<8x128xf32>
    %c0_3 = arith.constant 0 : index
    %c0_4 = arith.constant 0 : index
    %6 = vector.load %arg4[%c0_3, %c0_4] : memref<1x128xf32, #tpu.memory_space<vmem>>, vector<1x128xf32>
    %7 = vector.broadcast %6 : vector<1x128xf32> to vector<8x128xf32>
    %8 = arith.addf %5, %7 : vector<8x128xf32>
    %c0_5 = arith.constant 0 : index
    %c0_6 = arith.constant 0 : index
    %9 = vector.load %arg3[%c0_5, %c0_6] : memref<1x128xf32, #tpu.memory_space<vmem>>, vector<1x128xf32>
    %10 = vector.broadcast %9 : vector<1x128xf32> to vector<8x128xf32>
    %11 = arith.addf %4, %10 : vector<8x128xf32>
    %cst_7 = arith.constant 0.000000e+00 : f32
    %12 = vector.broadcast %cst_7 : f32 to vector<8x128xf32>
    %13 = arith.cmpf ogt, %11, %12 : vector<8x128xf32>
    %cst_8 = arith.constant 1.000000e-01 : f32
    %14 = vector.broadcast %cst_8 : f32 to vector<8x128xf32>
    %15 = arith.mulf %14, %11 : vector<8x128xf32>
    %16 = arith.select %13, %11, %15 : vector<8x128xi1>, vector<8x128xf32>
    %17 = arith.truncf %16 : vector<8x128xf32> to vector<8x128xbf16>
    %c0_9 = arith.constant 0 : index
    %c0_10 = arith.constant 0 : index
    %18 = vector.load %arg5[%c0_9, %c0_10] : memref<128x128xbf16, #tpu.memory_space<vmem>>, vector<128x128xbf16>
    %cst_11 = arith.constant dense<0.000000e+00> : vector<8x128xf32>
    %19 = tpu.matmul %17, %18, %cst_11 {dimension_numbers = #tpu.dot_dimension_numbers<[1], [0], [0], [1], [0, 0, 1, 1], [], []>} : vector<8x128xbf16>, vector<128x128xbf16>, vector<8x128xf32> -> vector<8x128xf32>
    %c0_12 = arith.constant 0 : index
    %c0_13 = arith.constant 0 : index
    %20 = vector.load %arg6[%c0_12, %c0_13] : memref<1x128xf32, #tpu.memory_space<vmem>>, vector<1x128xf32>
    %21 = vector.broadcast %20 : vector<1x128xf32> to vector<8x128xf32>
    %22 = arith.addf %19, %21 : vector<8x128xf32>
    %cst_14 = arith.constant 0.000000e+00 : f32
    %23 = vector.broadcast %cst_14 : f32 to vector<8x128xf32>
    %24 = arith.cmpf ogt, %22, %23 : vector<8x128xf32>
    %cst_15 = arith.constant 1.000000e-01 : f32
    %25 = vector.broadcast %cst_15 : f32 to vector<8x128xf32>
    %26 = arith.mulf %25, %22 : vector<8x128xf32>
    %27 = arith.select %24, %22, %26 : vector<8x128xi1>, vector<8x128xf32>
    %28 = arith.addf %27, %8 : vector<8x128xf32>
    %cst_16 = arith.constant 0.000000e+00 : f32
    %29 = vector.broadcast %cst_16 : f32 to vector<8x128xf32>
    %30 = arith.cmpf ogt, %28, %29 : vector<8x128xf32>
    %cst_17 = arith.constant 1.000000e-01 : f32
    %31 = vector.broadcast %cst_17 : f32 to vector<8x128xf32>
    %32 = arith.mulf %31, %28 : vector<8x128xf32>
    %33 = arith.select %30, %28, %32 : vector<8x128xi1>, vector<8x128xf32>
    %34 = tpu.iota {dimensions = array<i32: 1>} : vector<1x128xi32>
    %c32_i32 = arith.constant 32 : i32
    %35 = vector.broadcast %c32_i32 : i32 to vector<1x128xi32>
    %36 = arith.cmpi slt, %34, %35 : vector<1x128xi32>
    %37 = arith.extui %36 : vector<1x128xi1> to vector<1x128xi32>
    %38 = arith.sitofp %37 : vector<1x128xi32> to vector<1x128xf32>
    %39 = vector.broadcast %38 : vector<1x128xf32> to vector<8x128xf32>
    %40 = arith.mulf %33, %39 : vector<8x128xf32>
    %cst_18 = arith.constant dense<0.000000e+00> : vector<8xf32>
    %41 = vector.multi_reduction <add>, %40, %cst_18 [1] : vector<8x128xf32> to vector<8xf32>
    %42 = vector.shape_cast %41 : vector<8xf32> to vector<8x1xf32>
    %cst_19 = arith.constant 3.125000e-02 : f32
    %43 = vector.broadcast %cst_19 : f32 to vector<8x1xf32>
    %44 = arith.mulf %42, %43 : vector<8x1xf32>
    %45 = vector.broadcast %44 : vector<8x1xf32> to vector<8x128xf32>
    %46 = arith.subf %33, %45 : vector<8x128xf32>
    %47 = vector.broadcast %38 : vector<1x128xf32> to vector<8x128xf32>
    %48 = arith.mulf %46, %47 : vector<8x128xf32>
    %49 = arith.mulf %48, %48 : vector<8x128xf32>
    %cst_20 = arith.constant dense<0.000000e+00> : vector<8xf32>
    %50 = vector.multi_reduction <add>, %49, %cst_20 [1] : vector<8x128xf32> to vector<8xf32>
    %51 = vector.shape_cast %50 : vector<8xf32> to vector<8x1xf32>
    %cst_21 = arith.constant 3.125000e-02 : f32
    %52 = vector.broadcast %cst_21 : f32 to vector<8x1xf32>
    %53 = arith.mulf %51, %52 : vector<8x1xf32>
    %cst_22 = arith.constant 9.99999974E-6 : f32
    %54 = vector.broadcast %cst_22 : f32 to vector<8x1xf32>
    %55 = arith.addf %53, %54 : vector<8x1xf32>
    %56 = math.rsqrt %55 : vector<8x1xf32>
    %57 = vector.broadcast %56 : vector<8x1xf32> to vector<8x128xf32>
    %58 = arith.mulf %48, %57 : vector<8x128xf32>
    %c0_23 = arith.constant 0 : index
    %c0_24 = arith.constant 0 : index
    %59 = vector.load %arg7[%c0_23, %c0_24] : memref<1x128xf32, #tpu.memory_space<vmem>>, vector<1x128xf32>
    %60 = vector.broadcast %59 : vector<1x128xf32> to vector<8x128xf32>
    %61 = arith.mulf %58, %60 : vector<8x128xf32>
    %c0_25 = arith.constant 0 : index
    %c0_26 = arith.constant 0 : index
    %62 = vector.load %arg8[%c0_25, %c0_26] : memref<1x128xf32, #tpu.memory_space<vmem>>, vector<1x128xf32>
    %63 = vector.broadcast %62 : vector<1x128xf32> to vector<8x128xf32>
    %64 = arith.addf %61, %63 : vector<8x128xf32>
    %c0_27 = arith.constant 0 : index
    %c0_28 = arith.constant 0 : index
    %65 = vector.load %arg9[%c0_27, %c0_28] : memref<8x128xf32, #tpu.memory_space<vmem>>, vector<8x128xf32>
    tpu.vector_store %arg9[%c0_27, %c0_28], %64 {strides = array<i32>} : memref<8x128xf32, #tpu.memory_space<vmem>>, vector<8x128xf32>,
    return
  }
  func.func @transform_0(%arg0: i32) -> (i32, i32) {
    %c0_i32 = arith.constant 0 : i32
    %c0_i32_0 = arith.constant 0 : i32
    return %arg0, %c0_i32 : i32, i32
  }
  func.func @transform_1(%arg0: i32) -> (i32, i32) {
    %c0_i32 = arith.constant 0 : i32
    %c0_i32_0 = arith.constant 0 : i32
    %c0_i32_1 = arith.constant 0 : i32
    return %c0_i32, %c0_i32_0 : i32, i32
  }
  func.func @transform_2(%arg0: i32) -> (i32, i32) {
    %c0_i32 = arith.constant 0 : i32
    %c0_i32_0 = arith.constant 0 : i32
    %c0_i32_1 = arith.constant 0 : i32
    return %c0_i32, %c0_i32_0 : i32, i32
  }
  func.func @transform_3(%arg0: i32) -> (i32, i32) {
    %c0_i32 = arith.constant 0 : i32
    %c0_i32_0 = arith.constant 0 : i32
    %c0_i32_1 = arith.constant 0 : i32
    return %c0_i32, %c0_i32_0 : i32, i32
  }
  func.func @transform_4(%arg0: i32) -> (i32, i32) {
    %c0_i32 = arith.constant 0 : i32
    %c0_i32_0 = arith.constant 0 : i32
    %c0_i32_1 = arith.constant 0 : i32
    return %c0_i32, %c0_i32_0 : i32, i32
  }
  func.func @transform_5(%arg0: i32) -> (i32, i32) {
    %c0_i32 = arith.constant 0 : i32
    %c0_i32_0 = arith.constant 0 : i32
    %c0_i32_1 = arith.constant 0 : i32
    return %c0_i32, %c0_i32_0 : i32, i32
  }
  func.func @transform_6(%arg0: i32) -> (i32, i32) {
    %c0_i32 = arith.constant 0 : i32
    %c0_i32_0 = arith.constant 0 : i32
    %c0_i32_1 = arith.constant 0 : i32
    return %c0_i32, %c0_i32_0 : i32, i32
  }
  func.func @transform_7(%arg0: i32) -> (i32, i32) {
    %c0_i32 = arith.constant 0 : i32
    %c0_i32_0 = arith.constant 0 : i32
    %c0_i32_1 = arith.constant 0 : i32
    return %c0_i32, %c0_i32_0 : i32, i32
  }
  func.func @transform_8(%arg0: i32) -> (i32, i32) {
    %c0_i32 = arith.constant 0 : i32
    %c0_i32_0 = arith.constant 0 : i32
    return %arg0, %c0_i32 : i32, i32
  }
}

</mosaic_0001>

<llo_original>
// kernel: tpu_custom_call.1
$region0: #{tpu_custom_call.1}
  #allocation0 [shape = 'u32[]', space=smem, size = 0x4, offset = 0x4, fixed_abs, tag = 'smem constant byte address 0x4 - core index']
  #allocation1 [shape = 'u32[144,128]{1,0:T(1,128)}', space=vmem, size = 0x12000, scoped, tag = 'internal scratch']
  %s0 = inlined_call_operand.hbm [shape: f32[8,128], index: 0, kind: input, shape index: {}]
  %s1 = inlined_call_operand.hbm [shape: bf16[128,256], index: 1, kind: input, shape index: {}]
  %s2 = inlined_call_operand.vmem [shape: f32[1,128], index: 2, kind: input, shape index: {}]
  %s3 = inlined_call_operand.vmem [shape: f32[1,128], index: 3, kind: input, shape index: {}]
  %s4 = inlined_call_operand.hbm [shape: bf16[128,128], index: 4, kind: input, shape index: {}]
  %s5 = inlined_call_operand.vmem [shape: f32[1,128], index: 5, kind: input, shape index: {}]
  %s6 = inlined_call_operand.vmem [shape: f32[1,128], index: 6, kind: input, shape index: {}]
  %s7 = inlined_call_operand.vmem [shape: f32[1,128], index: 7, kind: input, shape index: {}]
  %s8 = inlined_call_operand.hbm [shape: f32[8,128], index: 8, kind: output, shape index: {}]
  %s9 = sld [smem:[#allocation0]]
  $region54: #{tpu_custom_call.1} parent=0
    _
  %s11 = ssub.s32 1, %s9
  %s12 = scalar_select 0, %s11, %s9
  $region1: #{tpu_custom_call.1} parent=0
    #allocation2 [shape = 'u8[4096]{0}', space=vmem, size = 0x1000, scoped, tag = 'input window, operand 0, single buffered']
    #allocation3 [shape = 's32[1]{0}', space=sflag, size = 0x4, scoped, tag = 'scoped memory for tpu_custom_call.1']
    #allocation4 [shape = 's32[1]{0}', space=sflag, size = 0x4, scoped, tag = 'scoped memory for tpu_custom_call.1']
    #allocation5 [shape = 'u8[65536]{0}', space=vmem, size = 0x10000, scoped, tag = 'input window, operand 1, single buffered']
    #allocation6 [shape = 's32[1]{0}', space=sflag, size = 0x4, scoped, tag = 'scoped memory for tpu_custom_call.1']
    #allocation7 [shape = 'u8[32768]{0}', space=vmem, size = 0x8000, scoped, tag = 'input window, operand 4, single buffered']
    #allocation8 [shape = 'u8[4096]{0}', space=vmem, size = 0x1000, scoped, tag = 'output window, operand 0, single buffered']
    %13 = vsyncpa [#allocation3], 0
    %14 = vsyncpa [#allocation6], 0
    %15 = vsyncpa [#allocation4], 0
    // Predicated region
    $region2: #{tpu_custom_call.1} parent=1 // pred_check
      _
    $region3: #{tpu_custom_call.1} parent=1 // pred_check_branch
      %17 = sbr.rel (0) target = $region5
    $region4: #{tpu_custom_call.1} parent=1 // pred_region
      %s19 = ssub.s32 128, 128
      %20 = vsyncadd [#allocation3], %s19
      %s22 = sshll.u32 [#allocation2], 4
      %s23 = int_to_ptr.vmem [resolvable:$true] %s22
      %25 = dma.hbm_to_vmem [thread:$0]  %s0, 128, %s23, [#allocation3]
    $region5: #{tpu_custom_call.1} parent=1 // pred_fallthru
      _
    // Predicated region
    $region6: #{tpu_custom_call.1} parent=1 // pred_check
      _
    $region7: #{tpu_custom_call.1} parent=1 // pred_check_branch
      %27 = sbr.rel (0) target = $region9
    $region8: #{tpu_custom_call.1} parent=1 // pred_region
      %s29 = ssub.s32 2048, 2048
      %30 = vsyncadd [#allocation6], %s29
      %s31 = sshll.u32 [#allocation5], 4
      %s32 = int_to_ptr.vmem [resolvable:$true] %s31
      %37 = dma.hbm_to_vmem [thread:$0]  %s1, 2048, %s32, [#allocation6], 128, 128, 8
    $region9: #{tpu_custom_call.1} parent=1 // pred_fallthru
      _
    // Predicated region
    $region10: #{tpu_custom_call.1} parent=1 // pred_check
      _
    $region11: #{tpu_custom_call.1} parent=1 // pred_check_branch
      %39 = sbr.rel (0) target = $region13
    $region12: #{tpu_custom_call.1} parent=1 // pred_region
      _
    $region13: #{tpu_custom_call.1} parent=1 // pred_fallthru
      _
    // Predicated region
    $region14: #{tpu_custom_call.1} parent=1 // pred_check
      _
    $region15: #{tpu_custom_call.1} parent=1 // pred_check_branch
      %41 = sbr.rel (0) target = $region17
    $region16: #{tpu_custom_call.1} parent=1 // pred_region
      _
    $region17: #{tpu_custom_call.1} parent=1 // pred_fallthru
      _
    // Predicated region
    $region18: #{tpu_custom_call.1} parent=1 // pred_check
      _
    $region19: #{tpu_custom_call.1} parent=1 // pred_check_branch
      %43 = sbr.rel (0) target = $region21
    $region20: #{tpu_custom_call.1} parent=1 // pred_region
      %s45 = ssub.s32 1024, 1024
      %46 = vsyncadd [#allocation6], %s45
      %s47 = sshll.u32 [#allocation7], 4
      %s48 = int_to_ptr.vmem [resolvable:$true] %s47
      %53 = dma.hbm_to_vmem [thread:$0]  %s4, 1024, %s48, [#allocation6], 64, 64, 4
    $region21: #{tpu_custom_call.1} parent=1 // pred_fallthru
      _
    // Predicated region
    $region22: #{tpu_custom_call.1} parent=1 // pred_check
      _
    $region23: #{tpu_custom_call.1} parent=1 // pred_check_branch
      %55 = sbr.rel (0) target = $region25
    $region24: #{tpu_custom_call.1} parent=1 // pred_region
      _
    $region25: #{tpu_custom_call.1} parent=1 // pred_fallthru
      _
    // Predicated region
    $region26: #{tpu_custom_call.1} parent=1 // pred_check
      _
    $region27: #{tpu_custom_call.1} parent=1 // pred_check_branch
      %57 = sbr.rel (0) target = $region29
    $region28: #{tpu_custom_call.1} parent=1 // pred_region
      _
    $region29: #{tpu_custom_call.1} parent=1 // pred_fallthru
      _
    // Predicated region
    $region30: #{tpu_custom_call.1} parent=1 // pred_check
      _
    $region31: #{tpu_custom_call.1} parent=1 // pred_check_branch
      %59 = sbr.rel (0) target = $region33
    $region32: #{tpu_custom_call.1} parent=1 // pred_region
      _
    $region33: #{tpu_custom_call.1} parent=1 // pred_fallthru
      _
    // Predicated region
    $region34: #{tpu_custom_call.1} parent=1 // pred_check
      _
    $region35: #{tpu_custom_call.1} parent=1 // pred_check_branch
      %61 = sbr.rel (0) target = $region37
    $region36: #{tpu_custom_call.1} parent=1 // pred_region
      %62 = dma.done [#allocation3], 128
    $region37: #{tpu_custom_call.1} parent=1 // pred_fallthru
      _
    // Predicated region
    $region38: #{tpu_custom_call.1} parent=1 // pred_check
      _
    $region39: #{tpu_custom_call.1} parent=1 // pred_check_branch
      %64 = sbr.rel (0) target = $region41
    $region40: #{tpu_custom_call.1} parent=1 // pred_region
      %65 = dma.done [#allocation6], 2048
    $region41: #{tpu_custom_call.1} parent=1 // pred_fallthru
      _
    // Predicated region
    $region42: #{tpu_custom_call.1} parent=1 // pred_check
      _
    $region43: #{tpu_custom_call.1} parent=1 // pred_check_branch
      %67 = sbr.rel (0) target = $region45
    $region44: #{tpu_custom_call.1} parent=1 // pred_region
      %68 = dma.done [#allocation6], 1024
    $region45: #{tpu_custom_call.1} parent=1 // pred_fallthru
      _
    %v70 = vld [vmem:[#allocation2] sm:$0xff]
    %v71 = vpack.c.bf16 %v70, %v70
    %v72 = vld [vmem:[#allocation5] sm:$0xff]
    %v73 = vld [vmem:[#allocation5 + $0x8] sm:$0xff]
    %v74 = vld [vmem:[#allocation5 + $0x10] sm:$0xff]
    %v75 = vld [vmem:[#allocation5 + $0x18] sm:$0xff]
    %v76 = vld [vmem:[#allocation5 + $0x20] sm:$0xff]
    %v77 = vld [vmem:[#allocation5 + $0x28] sm:$0xff]
    %v78 = vld [vmem:[#allocation5 + $0x30] sm:$0xff]
    %v79 = vld [vmem:[#allocation5 + $0x38] sm:$0xff]
    %v80 = vld [vmem:[#allocation5 + $0x40] sm:$0xff]
    %v81 = vld [vmem:[#allocation5 + $0x48] sm:$0xff]
    %v82 = vld [vmem:[#allocation5 + $0x50] sm:$0xff]
    %v83 = vld [vmem:[#allocation5 + $0x58] sm:$0xff]
    %v84 = vld [vmem:[#allocation5 + $0x60] sm:$0xff]
    %v85 = vld [vmem:[#allocation5 + $0x68] sm:$0xff]
    %v86 = vld [vmem:[#allocation5 + $0x70] sm:$0xff]
    %v87 = vld [vmem:[#allocation5 + $0x78] sm:$0xff]
    %v104 = vunpack.c.l.b16 %v72
    %v105 = vunpack.c.h.b16 %v72
    %v106 = vunpack.c.l.b16 %v73
    %v107 = vunpack.c.h.b16 %v73
    %v108 = vunpack.c.l.b16 %v74
    %v109 = vunpack.c.h.b16 %v74
    %v110 = vunpack.c.l.b16 %v75
    %v111 = vunpack.c.h.b16 %v75
    %v112 = vunpack.c.l.b16 %v76
    %v113 = vunpack.c.h.b16 %v76
    %v114 = vunpack.c.l.b16 %v77
    %v115 = vunpack.c.h.b16 %v77
    %v116 = vunpack.c.l.b16 %v78
    %v117 = vunpack.c.h.b16 %v78
    %v118 = vunpack.c.l.b16 %v79
    %v119 = vunpack.c.h.b16 %v79
    %v120 = vunpack.c.l.b16 %v80
    %v121 = vunpack.c.h.b16 %v80
    %v122 = vunpack.c.l.b16 %v81
    %v123 = vunpack.c.h.b16 %v81
    %v124 = vunpack.c.l.b16 %v82
    %v125 = vunpack.c.h.b16 %v82
    %v126 = vunpack.c.l.b16 %v83
    %v127 = vunpack.c.h.b16 %v83
    %v128 = vunpack.c.l.b16 %v84
    %v129 = vunpack.c.h.b16 %v84
    %v130 = vunpack.c.l.b16 %v85
    %v131 = vunpack.c.h.b16 %v85
    %v132 = vunpack.c.l.b16 %v86
    %v133 = vunpack.c.h.b16 %v86
    %v134 = vunpack.c.l.b16 %v87
    %v135 = vunpack.c.h.b16 %v87
    %v136 = vpack.c.b16 %v106, %v104
    %v137 = vpack.c.b16 %v107, %v105
    %v138 = vpack.c.b16 %v110, %v108
    %v139 = vpack.c.b16 %v111, %v109
    %v140 = vpack.c.b16 %v114, %v112
    %v141 = vpack.c.b16 %v115, %v113
    %v142 = vpack.c.b16 %v118, %v116
    %v143 = vpack.c.b16 %v119, %v117
    %v144 = vpack.c.b16 %v122, %v120
    %v145 = vpack.c.b16 %v123, %v121
    %v146 = vpack.c.b16 %v126, %v124
    %v147 = vpack.c.b16 %v127, %v125
    %v148 = vpack.c.b16 %v130, %v128
    %v149 = vpack.c.b16 %v131, %v129
    %v150 = vpack.c.b16 %v134, %v132
    %v151 = vpack.c.b16 %v135, %v133
    %168 = vmatprep.subr.bf16.mxu0 %v137
    %169 = vmatpush1.bf16.msra.mxu0 %v136
    %170 = vmatprep.subr.bf16.mxu0 %v139
    %171 = vmatpush1.bf16.msra.mxu0 %v138
    %172 = vmatprep.subr.bf16.mxu0 %v141
    %173 = vmatpush1.bf16.msra.mxu0 %v140
    %174 = vmatprep.subr.bf16.mxu0 %v143
    %175 = vmatpush1.bf16.msra.mxu0 %v142
    %176 = vmatprep.subr.bf16.mxu0 %v145
    %177 = vmatpush1.bf16.msra.mxu0 %v144
    %178 = vmatprep.subr.bf16.mxu0 %v147
    %179 = vmatpush1.bf16.msra.mxu0 %v146
    %180 = vmatprep.subr.bf16.mxu0 %v149
    %181 = vmatpush1.bf16.msra.mxu0 %v148
    %182 = vmatprep.subr.bf16.mxu0 %v151
    %183 = vmatpush1.bf16.msra.mxu0 %v150
    %184 = vmatprep.subr.bf16.mxu0 0
    %185 = vmatpush1.bf16.msra.mxu0 0
    %186 = vmatprep.subr.bf16.mxu0 0
    %187 = vmatpush1.bf16.msra.mxu0 0
    %188 = vmatprep.subr.bf16.mxu0 0
    %189 = vmatpush1.bf16.msra.mxu0 0
    %190 = vmatprep.subr.bf16.mxu0 0
    %191 = vmatpush1.bf16.msra.mxu0 0
    %192 = vmatprep.subr.bf16.mxu0 0
    %193 = vmatpush1.bf16.msra.mxu0 0
    %194 = vmatprep.subr.bf16.mxu0 0
    %195 = vmatpush1.bf16.msra.mxu0 0
    %196 = vmatprep.subr.bf16.mxu0 0
    %197 = vmatpush1.bf16.msra.mxu0 0
    %198 = vmatprep.subr.bf16.mxu0 0
    %199 = vmatpush1.bf16.msra.mxu0 0
    %200 = vmatprep.mubr.bf16.mxu0 0
    %201 = vmatmul.mubr.bf16.gmra.mrb[0].mxu0 %v71
    %v202 = vpop.f32.mrb[0].mxu0
    %v203 = vadd.f32 0.0, %v202
    %v204 = vpop.f32.mrb[0].mxu0
    %v205 = vadd.f32 0.0, %v204
    %v206 = vpop.f32.mrb[0].mxu0
    %v207 = vpop.f32.mrb[0].mxu0
    %208 = vdwg.mxu0
    %v209 = vld [vmem:[%s3] sm:$0x1]
    %v211 = vlaneseq
    %v212 = vshrl.u32 %v211, 7
    %v213 = vsub.s32 0, %v212
    %v214 = vrot.slane %v209, %v213
    %v216 = vadd.f32 %v205, %v214
    %v217 = vld [vmem:[%s2] sm:$0x1]
    %v219 = vlaneseq
    %v220 = vshrl.u32 %v219, 7
    %v221 = vsub.s32 0, %v220
    %v222 = vrot.slane %v217, %v221
    %v224 = vadd.f32 %v203, %v222
    %vm225 = vcmp.gt.f32.partialorder %v224, 0.0
    %v226 = vmul.f32 %v224, 0.1
    %v227 = vsel %vm225, %v224, %v226
    %v228 = vpack.c.bf16 %v227, %v227
    %v229 = vld [vmem:[#allocation7] sm:$0xf]
    %v230 = vld [vmem:[#allocation7 + $0x4] sm:$0xf]
    %v231 = vld [vmem:[#allocation7 + $0x8] sm:$0xf]
    %v232 = vld [vmem:[#allocation7 + $0xc] sm:$0xf]
    %v233 = vld [vmem:[#allocation7 + $0x10] sm:$0xf]
    %v234 = vld [vmem:[#allocation7 + $0x14] sm:$0xf]
    %v235 = vld [vmem:[#allocation7 + $0x18] sm:$0xf]
    %v236 = vld [vmem:[#allocation7 + $0x1c] sm:$0xf]
    %v237 = vld [vmem:[#allocation7 + $0x20] sm:$0xf]
    %v238 = vld [vmem:[#allocation7 + $0x24] sm:$0xf]
    %v239 = vld [vmem:[#allocation7 + $0x28] sm:$0xf]
    %v240 = vld [vmem:[#allocation7 + $0x2c] sm:$0xf]
    %v241 = vld [vmem:[#allocation7 + $0x30] sm:$0xf]
    %v242 = vld [vmem:[#allocation7 + $0x34] sm:$0xf]
    %v243 = vld [vmem:[#allocation7 + $0x38] sm:$0xf]
    %v244 = vld [vmem:[#allocation7 + $0x3c] sm:$0xf]
    %v245 = vld [vmem:[%s5] sm:$0x1]
    %v247 = vlaneseq
    %v248 = vshrl.u32 %v247, 7
    %v249 = vsub.s32 0, %v248
    %v250 = vrot.slane %v245, %v249
    %v268 = vunpack.c.l.b16 %v229
    %v269 = vunpack.c.l.b16 %v230
    %v270 = vunpack.c.l.b16 %v231
    %v271 = vunpack.c.l.b16 %v232
    %v272 = vunpack.c.l.b16 %v233
    %v273 = vunpack.c.l.b16 %v234
    %v274 = vunpack.c.l.b16 %v235
    %v275 = vunpack.c.l.b16 %v236
    %v276 = vunpack.c.l.b16 %v237
    %v277 = vunpack.c.l.b16 %v238
    %v278 = vunpack.c.l.b16 %v239
    %v279 = vunpack.c.l.b16 %v240
    %v280 = vunpack.c.l.b16 %v241
    %v281 = vunpack.c.l.b16 %v242
    %v282 = vunpack.c.l.b16 %v243
    %v283 = vunpack.c.l.b16 %v244
    %v284 = vpack.c.b16 %v269, %v268
    %v285 = vpack.c.b16 %v271, %v270
    %v286 = vpack.c.b16 %v273, %v272
    %v287 = vpack.c.b16 %v275, %v274
    %v288 = vpack.c.b16 %v277, %v276
    %v289 = vpack.c.b16 %v279, %v278
    %v290 = vpack.c.b16 %v281, %v280
    %v291 = vpack.c.b16 %v283, %v282
    %300 = vmatprep.subr.bf16.mxu0 0
    %301 = vmatpush1.bf16.msra.mxu0 %v284
    %302 = vmatprep.subr.bf16.mxu0 0
    %303 = vmatpush1.bf16.msra.mxu0 %v285
    %304 = vmatprep.subr.bf16.mxu0 0
    %305 = vmatpush1.bf16.msra.mxu0 %v286
    %306 = vmatprep.subr.bf16.mxu0 0
    %307 = vmatpush1.bf16.msra.mxu0 %v287
    %308 = vmatprep.subr.bf16.mxu0 0
    %309 = vmatpush1.bf16.msra.mxu0 %v288
    %310 = vmatprep.subr.bf16.mxu0 0
    %311 = vmatpush1.bf16.msra.mxu0 %v289
    %312 = vmatprep.subr.bf16.mxu0 0
    %313 = vmatpush1.bf16.msra.mxu0 %v290
    %314 = vmatprep.subr.bf16.mxu0 0
    %315 = vmatpush1.bf16.msra.mxu0 %v291
    %316 = vmatprep.subr.bf16.mxu0 0
    %317 = vmatpush1.bf16.msra.mxu0 0
    %318 = vmatprep.subr.bf16.mxu0 0
    %319 = vmatpush1.bf16.msra.mxu0 0
    %320 = vmatprep.subr.bf16.mxu0 0
    %321 = vmatpush1.bf16.msra.mxu0 0
    %322 = vmatprep.subr.bf16.mxu0 0
    %323 = vmatpush1.bf16.msra.mxu0 0
    %324 = vmatprep.subr.bf16.mxu0 0
    %325 = vmatpush1.bf16.msra.mxu0 0
    %326 = vmatprep.subr.bf16.mxu0 0
    %327 = vmatpush1.bf16.msra.mxu0 0
    %328 = vmatprep.subr.bf16.mxu0 0
    %329 = vmatpush1.bf16.msra.mxu0 0
    %330 = vmatprep.subr.bf16.mxu0 0
    %331 = vmatpush1.bf16.msra.mxu0 0
    %332 = vmatprep.mubr.bf16.mxu0 0
    %333 = vmatmul.mubr.bf16.gmra.mrb[0].mxu0 %v228
    %v334 = vpop.f32.mrb[0].mxu0
    %v335 = vadd.f32 %v250, %v334
    %v336 = vpop.f32.mrb[0].mxu0
    %v337 = vpop.f32.mrb[0].mxu0
    %v338 = vpop.f32.mrb[0].mxu0
    %339 = vdwg.mxu0
    %vm340 = vcmp.gt.f32.partialorder %v335, 0.0
    %v341 = vmul.f32 %v335, 0.1
    %v342 = vsel %vm340, %v335, %v341
    %v343 = vadd.f32 %v342, %v216
    %vm344 = vcmp.gt.f32.partialorder %v343, 0.0
    %v345 = vmul.f32 %v343, 0.1
    %v346 = vsel %vm344, %v343, %v345
    %v347 = vlaneseq
    %v348 = vand.u32 %v347, 127
    %vm349 = vcmp.lt.s32.totalorder %v348, 32
    %v350 = vsel %vm349, 1, 0
    %v351 = vcvt.s32.f32 %v350
    %v352 = vmul.f32 %v346, %v351
    %353 = vadd.xlane.f32.xlu0 %v352
    %v354 = vpop.xlane.xlu0 %353
    %v355 = vmul.f32 %v354, 0.03125
    %v356 = vsub.f32 %v346, %v355
    %v357 = vmul.f32 %v356, %v351
    %v358 = vmul.f32 %v357, %v357
    %359 = vadd.xlane.f32.xlu0 %v358
    %v360 = vpop.xlane.xlu0 %359
    %v361 = vmul.f32 %v360, 0.03125
    %v362 = vadd.f32 %v361, 1e-05
    %v363 = vrsqrt.pop %v362
    %v364 = vmul.f32 %v357, %v363
    %v365 = vld [vmem:[%s6] sm:$0x1]
    %v367 = vlaneseq
    %v368 = vshrl.u32 %v367, 7
    %v369 = vsub.s32 0, %v368
    %v370 = vrot.slane %v365, %v369
    %v372 = vmul.f32 %v364, %v370
    %v373 = vld [vmem:[%s7] sm:$0x1]
    %v375 = vlaneseq
    %v376 = vshrl.u32 %v375, 7
    %v377 = vsub.s32 0, %v376
    %v378 = vrot.slane %v373, %v377
    %v380 = vadd.f32 %v372, %v378
    %381 = vst [vmem:[#allocation8] sm:$0xff] %v380
    // Predicated region
    $region46: #{tpu_custom_call.1} parent=1 // pred_check
      _
    $region47: #{tpu_custom_call.1} parent=1 // pred_check_branch
      %383 = sbr.rel (0) target = $region49
    $region48: #{tpu_custom_call.1} parent=1 // pred_region
      %s385 = ssub.s32 128, 128
      %386 = vsyncadd [#allocation4], %s385
      %s388 = sshll.u32 [#allocation8], 4
      %s389 = int_to_ptr.vmem [resolvable:$true] %s388
      %391 = dma.vmem_to_hbm [thread:$0]  %s389, 128, %s8, [#allocation4]
    $region49: #{tpu_custom_call.1} parent=1 // pred_fallthru
      _
    // Predicated region
    $region50: #{tpu_custom_call.1} parent=1 // pred_check
      _
    $region51: #{tpu_custom_call.1} parent=1 // pred_check_branch
      %393 = sbr.rel (0) target = $region53
    $region52: #{tpu_custom_call.1} parent=1 // pred_region
      %394 = dma.done [#allocation4], 128
    $region53: #{tpu_custom_call.1} parent=1 // pred_fallthru
      _
    %395 = vsyncpa [#allocation3], 1
    %396 = vsyncpa [#allocation6], 1
    %397 = vsyncpa [#allocation4], 1

</llo_original>
